<compile_context>
chip_gen: v7x
topology: tpu7x:2x2x1
jax: 0.10.0
libtpu: 0.0.40
codegen_flags: <defaults>
</compile_context>

<pallas_src>
import functools

import jax
import jax.numpy as jnp
from jax.experimental import pallas as pl
from jax.experimental.pallas import tpu as pltpu


def _cdiv(a, b):
    return -(-a // b)


def _dw_kernel(x_ref, w_ref, b_ref, o_ref, *, kh, kw, dm, s, d,
               wp_s, l_phase, lout, chunk):
    """One grid step: `blk` (batch*channel) rows with full flattened phase planes.

    x_ref: (blk, s*s*l_phase)  flattened, phase-de-interleaved input planes
    w_ref: (blk, dm*kh*kw)     per-row depthwise taps (f32)
    b_ref: (blk, dm)           per-row bias (f32)
    o_ref: (blk, dm*lout)      flattened full-width output planes (lout = ho*wp_s)
    """
    w_all = w_ref[...].astype(jnp.float32)     # tiny, load once
    b_all = b_ref[...].astype(jnp.float32)

    def do_span(start, length):
        # start: flat output offset (static or traced); length: static chunk length.
        for m in range(dm):
            acc = None
            for i in range(kh):
                ph_r, r_off = (i * d) % s, (i * d) // s
                for j in range(kw):
                    ph_c, c_off = (j * d) % s, (j * d) // s
                    base = (ph_r * s + ph_c) * l_phase + r_off * wp_s + c_off
                    patch = x_ref[:, pl.ds(base + start, length)].astype(jnp.float32)
                    t = m * (kh * kw) + i * kw + j
                    w_col = w_all[:, t:t + 1]                  # (blk, 1) per-row tap
                    term = w_col * patch
                    acc = term if acc is None else acc + term
            acc = acc + b_all[:, m:m + 1]
            o_ref[:, pl.ds(m * lout + start, length)] = acc.astype(o_ref.dtype)

    n_full, tail = lout // chunk, lout % chunk
    if n_full == 1:
        do_span(0, chunk)
    elif n_full > 1:
        def body(q, carry):
            do_span(q * chunk, chunk)
            return carry
        jax.lax.fori_loop(0, n_full, body, 0)
    if tail:
        do_span(n_full * chunk, tail)


def depthwise_conv2d(x, weight, bias=None, *, stride=1, padding=0, dilation=1,
                     depth_multiplier=1):
    """Depthwise conv matching nn.Conv2d(C, C*dm, k, stride, padding, dilation, groups=C).

    x      : (N, C, H, W)
    weight : (C*dm, 1, KH, KW)   (PyTorch OIHW, I=1)
    bias   : (C*dm,) or None
    returns: (N, C*dm, Ho, Wo) in NCHW.
    """
    n, c, h, w = x.shape
    cout, cin_g, kh, kw = weight.shape
    dm = int(depth_multiplier)
    assert cin_g == 1 and cout == c * dm
    s, d, p = int(stride), int(dilation), int(padding)

    ho = (h + 2 * p - d * (kh - 1) - 1) // s + 1
    wo = (w + 2 * p - d * (kw - 1) - 1) // s + 1
    assert ho > 0 and wo > 0

    hp, wp = h + 2 * p, w + 2 * p
    hp_s, wp_s = _cdiv(hp, s), _cdiv(wp, s)              # phase-plane extents
    r_off_max, c_off_max = (d * (kh - 1)) // s, (d * (kw - 1)) // s
    # Guard rows so every flat tap window stays inside its phase plane.
    need = (r_off_max + ho) * wp_s + c_off_max
    guard = _cdiv(max(0, need - hp_s * wp_s), wp_s)
    hp_g = hp_s + guard
    l_phase = hp_g * wp_s                                # flat length of one phase plane
    lt = s * s * l_phase                                 # flat length of all phases
    lout = ho * wp_s                                     # flat full-width output length

    # Zero-pad: conv padding + round H,W up to stride multiples (+ guard rows).
    hp_pad, wp_pad = hp_g * s, wp_s * s
    x_pad = jnp.pad(x, ((0, 0), (0, 0),
                        (p, hp_pad - h - p), (p, wp_pad - w - p)))
    # One-time stride de-interleave into (pr, pc) phase planes, then flatten per row.
    x_rows = (x_pad.reshape(n, c, hp_g, s, wp_s, s)
              .transpose(0, 1, 3, 5, 2, 4)
              .reshape(n * c, lt))

    taps = dm * kh * kw
    w_rows = jnp.tile(weight[:, 0].reshape(c, taps), (n, 1)).astype(jnp.float32)
    if bias is None:
        bias = jnp.zeros((cout,), jnp.float32)
    b_rows = jnp.tile(bias.reshape(c, dm), (n, 1)).astype(jnp.float32)

    # ---- blocking: pack (batch*channel) rows on sublanes, ~1 MiB per grid step ----
    rows = n * c
    itemsize = jnp.dtype(x.dtype).itemsize
    per_row_bytes = (lt + dm * lout) * itemsize
    blk_target = max(1, (1 << 20) // max(per_row_bytes, 1))
    blk_cap = max(1, (8 << 20) // max(per_row_bytes, 1))     # keep a block well under VMEM
    blk = min(rows, blk_cap, blk_target)
    if rows >= 8 and blk_cap >= 8:
        blk = max(8, (blk // 8) * 8)                         # full sublane packing
    blk = min(blk, rows, max(blk_cap, 1))
    n_blocks = _cdiv(rows, blk)
    # Keep >=2 grid steps when there is enough work (v7x has 2 TensorCores per chip).
    while n_blocks < 2 and blk > 8 and rows > 8:
        blk = max(8, (blk // 16) * 8)
        n_blocks = _cdiv(rows, blk)
    rows_pad = n_blocks * blk
    pad_r = rows_pad - rows

    x_b = jnp.pad(x_rows, ((0, pad_r), (0, 0))).reshape(n_blocks, blk, lt)
    w_b = jnp.pad(w_rows, ((0, pad_r), (0, 0))).reshape(n_blocks, blk, taps)
    b_b = jnp.pad(b_rows, ((0, pad_r), (0, 0))).reshape(n_blocks, blk, dm)

    # ---- chunk the flat output so acc + patch stay ~10 live vregs ----
    sub_groups = _cdiv(blk, 8)
    chunk = min(lout, 128 * max(1, 10 // sub_groups))

    # ---- VMEM budget: actual double-buffered footprint, capped with headroom ----
    in_blk_b = blk * lt * itemsize
    out_blk_b = blk * dm * lout * itemsize
    wb_b = blk * (taps + dm) * 4
    need_vmem = 2 * (in_blk_b + out_blk_b + wb_b) + (2 << 20)
    try:
        cap = int(pltpu.get_tpu_info().vmem_capacity_bytes) * 7 // 8
    except Exception:
        cap = 48 << 20
    vmem_limit = int(min(cap, max(16 << 20, need_vmem)))

    cost = pl.CostEstimate(
        flops=2 * n * c * dm * kh * kw * ho * wo,
        transcendentals=0,
        bytes_accessed=int(x_b.size * itemsize
                           + w_b.size * w_b.dtype.itemsize
                           + b_b.size * b_b.dtype.itemsize
                           + rows_pad * dm * lout * itemsize),
    )

    kernel = functools.partial(
        _dw_kernel, kh=kh, kw=kw, dm=dm, s=s, d=d,
        wp_s=wp_s, l_phase=l_phase, lout=lout, chunk=chunk)

    out = pl.pallas_call(
        kernel,
        out_shape=jax.ShapeDtypeStruct((n_blocks, blk, dm * lout), x.dtype),
        grid_spec=pltpu.PrefetchScalarGridSpec(
            num_scalar_prefetch=0,
            grid=(n_blocks,),
            in_specs=[
                pl.BlockSpec((None, blk, lt), lambda r: (r, 0, 0)),
                pl.BlockSpec((None, blk, taps), lambda r: (r, 0, 0)),
                pl.BlockSpec((None, blk, dm), lambda r: (r, 0, 0)),
            ],
            out_specs=pl.BlockSpec((None, blk, dm * lout), lambda r: (r, 0, 0)),
        ),
        compiler_params=pltpu.CompilerParams(
            dimension_semantics=("parallel",),
            vmem_limit_bytes=vmem_limit,
        ),
        cost_estimate=cost,
    )(x_b, w_b, b_b)

    # Drop padded rows / garbage columns; unflatten to NCHW.  (Garbage columns >= wo
    # contain shifted neighbours, never zero-assumed; they must not be consumed.)
    out = out.reshape(rows_pad, dm * lout)[:rows]
    out = out.reshape(n, c * dm, ho, wp_s)[:, :, :, :wo]
    return out


def _reference(x, weight, bias, *, stride, padding, dilation):
    c = x.shape[1]
    out = jax.lax.conv_general_dilated(
        x, weight,
        window_strides=(stride, stride),
        padding=((padding, padding), (padding, padding)),
        rhs_dilation=(dilation, dilation),
        dimension_numbers=("NCHW", "OIHW", "NCHW"),
        feature_group_count=c,
    )
    if bias is not None:
        out = out + bias[None, :, None, None]
    return out


def _run_case(key, *, n, c, h, w, k, stride, padding, dilation, dm, use_bias):
    kx, kw_, kb = jax.random.split(key, 3)
    cout = c * dm
    x = jax.random.normal(kx, (n, c, h, w), dtype=jnp.float32)
    fan_in = k * k
    weight = jax.random.normal(kw_, (cout, 1, k, k), jnp.float32) * jnp.sqrt(2.0 / fan_in)
    bias = None
    if use_bias:
        bound = 1.0 / jnp.sqrt(fan_in)
        bias = jax.random.uniform(kb, (cout,), jnp.float32, minval=-bound, maxval=bound)
    out = depthwise_conv2d(x, weight, bias, stride=stride, padding=padding,
                           dilation=dilation, depth_multiplier=dm)
    out = jax.block_until_ready(out)
    ref = _reference(x, weight, bias, stride=stride, padding=padding, dilation=dilation)
    assert out.shape == ref.shape, (out.shape, ref.shape)
    err = float(jnp.max(jnp.abs(out - ref)))
    assert jnp.allclose(out, ref, atol=1e-4, rtol=1e-4), err
    return out


if __name__ == "__main__":
    key = jax.random.PRNGKey(0)
    # Module config: DepthwiseConv2D(in_channels=4, kernel_size=3, stride=1, padding=1,
    #                                dilation=1, bias=True, depth_multiplier=1)
    _run_case(key, n=2, c=4, h=16, w=16, k=3, stride=1, padding=1, dilation=1,
              dm=1, use_bias=True)
    # Extra small-shape coverage of the general path (review correctness concern):
    # stride>1, dilation>1, depth_multiplier>1, no-bias, and the chunked-output path.
    extra = [
        dict(n=2, c=4, h=12, w=10, k=3, stride=2, padding=1, dilation=1, dm=1, use_bias=True),
        dict(n=1, c=3, h=11, w=9, k=3, stride=1, padding=2, dilation=2, dm=2, use_bias=True),
        dict(n=2, c=5, h=13, w=12, k=3, stride=2, padding=2, dilation=2, dm=1, use_bias=False),
        dict(n=1, c=8, h=62, w=62, k=3, stride=1, padding=1, dilation=1, dm=1, use_bias=True),
    ]
    for i, cfg in enumerate(extra):
        _run_case(jax.random.fold_in(key, i + 1), **cfg)
    print("KERNEL_OK")
</pallas_src>

<mosaic_0001>
module attributes {stable_mosaic.version = 11 : i64} {
  func.func @_dw_kernel(%arg0: i32, %arg1: memref<1x8x342xf32, #tpu.memory_space<vmem>>, %arg2: memref<1x8x9xf32, #tpu.memory_space<vmem>>, %arg3: memref<1x8x1xf32, #tpu.memory_space<vmem>>, %arg4: memref<1x8x288xf32, #tpu.memory_space<vmem>>) attributes {dimension_semantics = [#tpu.dimension_semantics<parallel>], iteration_bounds = array<i64: 1>, scalar_prefetch = 0 : i64, scratch_operands = 0 : i64, tpu.core_type = #tpu.core_type<tc>, window_params = [{transform_indices = @transform_0, window_bounds = array<i64: 1, 8, 342>}, {transform_indices = @transform_1, window_bounds = array<i64: 1, 8, 9>}, {transform_indices = @transform_2, window_bounds = array<i64: 1, 8, 1>}, {transform_indices = @transform_3, window_bounds = array<i64: 1, 8, 288>}]} {
    %c0 = arith.constant 0 : index
    %c0_0 = arith.constant 0 : index
    %c0_1 = arith.constant 0 : index
    %0 = vector.load %arg2[%c0, %c0_0, %c0_1] : memref<1x8x9xf32, #tpu.memory_space<vmem>>, vector<1x8x9xf32>
    %1 = vector.shape_cast %0 : vector<1x8x9xf32> to vector<8x9xf32>
    %c0_2 = arith.constant 0 : index
    %c0_3 = arith.constant 0 : index
    %c0_4 = arith.constant 0 : index
    %2 = vector.load %arg3[%c0_2, %c0_3, %c0_4] : memref<1x8x1xf32, #tpu.memory_space<vmem>>, vector<1x8x1xf32>
    %3 = vector.shape_cast %2 : vector<1x8x1xf32> to vector<8x1xf32>
    %c0_5 = arith.constant 0 : index
    %c0_6 = arith.constant 0 : index
    %c0_7 = arith.constant 0 : index
    %4 = vector.load %arg1[%c0_5, %c0_6, %c0_7] : memref<1x8x342xf32, #tpu.memory_space<vmem>>, vector<1x8x288xf32>
    %5 = vector.shape_cast %4 : vector<1x8x288xf32> to vector<8x288xf32>
    %6 = vector.extract_strided_slice %1 {offsets = [0, 0], sizes = [8, 1], strides = [1, 1]} : vector<8x9xf32> to vector<8x1xf32>
    %7 = vector.broadcast %6 : vector<8x1xf32> to vector<8x288xf32>
    %8 = arith.mulf %7, %5 : vector<8x288xf32>
    %c0_8 = arith.constant 0 : index
    %c0_9 = arith.constant 0 : index
    %c1 = arith.constant 1 : index
    %9 = vector.load %arg1[%c0_8, %c0_9, %c1] : memref<1x8x342xf32, #tpu.memory_space<vmem>>, vector<1x8x288xf32>
    %10 = vector.shape_cast %9 : vector<1x8x288xf32> to vector<8x288xf32>
    %11 = vector.extract_strided_slice %1 {offsets = [0, 1], sizes = [8, 1], strides = [1, 1]} : vector<8x9xf32> to vector<8x1xf32>
    %12 = vector.broadcast %11 : vector<8x1xf32> to vector<8x288xf32>
    %13 = arith.mulf %12, %10 : vector<8x288xf32>
    %14 = arith.addf %8, %13 : vector<8x288xf32>
    %c0_10 = arith.constant 0 : index
    %c0_11 = arith.constant 0 : index
    %c2 = arith.constant 2 : index
    %15 = vector.load %arg1[%c0_10, %c0_11, %c2] : memref<1x8x342xf32, #tpu.memory_space<vmem>>, vector<1x8x288xf32>
    %16 = vector.shape_cast %15 : vector<1x8x288xf32> to vector<8x288xf32>
    %17 = vector.extract_strided_slice %1 {offsets = [0, 2], sizes = [8, 1], strides = [1, 1]} : vector<8x9xf32> to vector<8x1xf32>
    %18 = vector.broadcast %17 : vector<8x1xf32> to vector<8x288xf32>
    %19 = arith.mulf %18, %16 : vector<8x288xf32>
    %20 = arith.addf %14, %19 : vector<8x288xf32>
    %c0_12 = arith.constant 0 : index
    %c0_13 = arith.constant 0 : index
    %c18 = arith.constant 18 : index
    %21 = vector.load %arg1[%c0_12, %c0_13, %c18] : memref<1x8x342xf32, #tpu.memory_space<vmem>>, vector<1x8x288xf32>
    %22 = vector.shape_cast %21 : vector<1x8x288xf32> to vector<8x288xf32>
    %23 = vector.extract_strided_slice %1 {offsets = [0, 3], sizes = [8, 1], strides = [1, 1]} : vector<8x9xf32> to vector<8x1xf32>
    %24 = vector.broadcast %23 : vector<8x1xf32> to vector<8x288xf32>
    %25 = arith.mulf %24, %22 : vector<8x288xf32>
    %26 = arith.addf %20, %25 : vector<8x288xf32>
    %c0_14 = arith.constant 0 : index
    %c0_15 = arith.constant 0 : index
    %c19 = arith.constant 19 : index
    %27 = vector.load %arg1[%c0_14, %c0_15, %c19] : memref<1x8x342xf32, #tpu.memory_space<vmem>>, vector<1x8x288xf32>
    %28 = vector.shape_cast %27 : vector<1x8x288xf32> to vector<8x288xf32>
    %29 = vector.extract_strided_slice %1 {offsets = [0, 4], sizes = [8, 1], strides = [1, 1]} : vector<8x9xf32> to vector<8x1xf32>
    %30 = vector.broadcast %29 : vector<8x1xf32> to vector<8x288xf32>
    %31 = arith.mulf %30, %28 : vector<8x288xf32>
    %32 = arith.addf %26, %31 : vector<8x288xf32>
    %c0_16 = arith.constant 0 : index
    %c0_17 = arith.constant 0 : index
    %c20 = arith.constant 20 : index
    %33 = vector.load %arg1[%c0_16, %c0_17, %c20] : memref<1x8x342xf32, #tpu.memory_space<vmem>>, vector<1x8x288xf32>
    %34 = vector.shape_cast %33 : vector<1x8x288xf32> to vector<8x288xf32>
    %35 = vector.extract_strided_slice %1 {offsets = [0, 5], sizes = [8, 1], strides = [1, 1]} : vector<8x9xf32> to vector<8x1xf32>
    %36 = vector.broadcast %35 : vector<8x1xf32> to vector<8x288xf32>
    %37 = arith.mulf %36, %34 : vector<8x288xf32>
    %38 = arith.addf %32, %37 : vector<8x288xf32>
    %c0_18 = arith.constant 0 : index
    %c0_19 = arith.constant 0 : index
    %c36 = arith.constant 36 : index
    %39 = vector.load %arg1[%c0_18, %c0_19, %c36] : memref<1x8x342xf32, #tpu.memory_space<vmem>>, vector<1x8x288xf32>
    %40 = vector.shape_cast %39 : vector<1x8x288xf32> to vector<8x288xf32>
    %41 = vector.extract_strided_slice %1 {offsets = [0, 6], sizes = [8, 1], strides = [1, 1]} : vector<8x9xf32> to vector<8x1xf32>
    %42 = vector.broadcast %41 : vector<8x1xf32> to vector<8x288xf32>
    %43 = arith.mulf %42, %40 : vector<8x288xf32>
    %44 = arith.addf %38, %43 : vector<8x288xf32>
    %c0_20 = arith.constant 0 : index
    %c0_21 = arith.constant 0 : index
    %c37 = arith.constant 37 : index
    %45 = vector.load %arg1[%c0_20, %c0_21, %c37] : memref<1x8x342xf32, #tpu.memory_space<vmem>>, vector<1x8x288xf32>
    %46 = vector.shape_cast %45 : vector<1x8x288xf32> to vector<8x288xf32>
    %47 = vector.extract_strided_slice %1 {offsets = [0, 7], sizes = [8, 1], strides = [1, 1]} : vector<8x9xf32> to vector<8x1xf32>
    %48 = vector.broadcast %47 : vector<8x1xf32> to vector<8x288xf32>
    %49 = arith.mulf %48, %46 : vector<8x288xf32>
    %50 = arith.addf %44, %49 : vector<8x288xf32>
    %c0_22 = arith.constant 0 : index
    %c0_23 = arith.constant 0 : index
    %c38 = arith.constant 38 : index
    %51 = vector.load %arg1[%c0_22, %c0_23, %c38] : memref<1x8x342xf32, #tpu.memory_space<vmem>>, vector<1x8x288xf32>
    %52 = vector.shape_cast %51 : vector<1x8x288xf32> to vector<8x288xf32>
    %53 = vector.extract_strided_slice %1 {offsets = [0, 8], sizes = [8, 1], strides = [1, 1]} : vector<8x9xf32> to vector<8x1xf32>
    %54 = vector.broadcast %53 : vector<8x1xf32> to vector<8x288xf32>
    %55 = arith.mulf %54, %52 : vector<8x288xf32>
    %56 = arith.addf %50, %55 : vector<8x288xf32>
    %57 = vector.broadcast %3 : vector<8x1xf32> to vector<8x288xf32>
    %58 = arith.addf %56, %57 : vector<8x288xf32>
    %c0_24 = arith.constant 0 : index
    %c0_25 = arith.constant 0 : index
    %c0_26 = arith.constant 0 : index
    %59 = vector.load %arg4[%c0_24, %c0_25, %c0_26] : memref<1x8x288xf32, #tpu.memory_space<vmem>>, vector<1x8x288xf32>
    %60 = vector.shape_cast %59 : vector<1x8x288xf32> to vector<8x288xf32>
    %61 = vector.shape_cast %58 : vector<8x288xf32> to vector<1x8x288xf32>
    tpu.vector_store %arg4[%c0_24, %c0_25, %c0_26], %61 {strides = array<i32>} : memref<1x8x288xf32, #tpu.memory_space<vmem>>, vector<1x8x288xf32>,
    return
  }
  func.func @transform_0(%arg0: i32) -> (i32, i32, i32) {
    %c0_i32 = arith.constant 0 : i32
    %c0_i32_0 = arith.constant 0 : i32
    %c0_i32_1 = arith.constant 0 : i32
    return %arg0, %c0_i32, %c0_i32_0 : i32, i32, i32
  }
  func.func @transform_1(%arg0: i32) -> (i32, i32, i32) {
    %c0_i32 = arith.constant 0 : i32
    %c0_i32_0 = arith.constant 0 : i32
    %c0_i32_1 = arith.constant 0 : i32
    return %arg0, %c0_i32, %c0_i32_0 : i32, i32, i32
  }
  func.func @transform_2(%arg0: i32) -> (i32, i32, i32) {
    %c0_i32 = arith.constant 0 : i32
    %c0_i32_0 = arith.constant 0 : i32
    %c0_i32_1 = arith.constant 0 : i32
    return %arg0, %c0_i32, %c0_i32_0 : i32, i32, i32
  }
  func.func @transform_3(%arg0: i32) -> (i32, i32, i32) {
    %c0_i32 = arith.constant 0 : i32
    %c0_i32_0 = arith.constant 0 : i32
    %c0_i32_1 = arith.constant 0 : i32
    return %arg0, %c0_i32, %c0_i32_0 : i32, i32, i32
  }
}

</mosaic_0001>

<llo_original>
// kernel: tpu_custom_call.1
$region0: #{tpu_custom_call.1}
  #allocation0 [shape = 'u32[]', space=smem, size = 0x4, offset = 0x4, fixed_abs, tag = 'smem constant byte address 0x4 - core index']
  #allocation1 [shape = 'u32[144,128]{1,0:T(1,128)}', space=vmem, size = 0x12000, scoped, tag = 'internal scratch']
  %s0 = inlined_call_operand.hbm [shape: f32[1,8,342], index: 0, kind: input, shape index: {}]
  %s1 = inlined_call_operand.vmem [shape: f32[1,8,9], index: 1, kind: input, shape index: {}]
  %s2 = inlined_call_operand.vmem [shape: f32[1,8,1], index: 2, kind: input, shape index: {}]
  %s3 = inlined_call_operand.hbm [shape: f32[1,8,288], index: 3, kind: output, shape index: {}]
  %s4 = sld [smem:[#allocation0]]
  $region26: #{tpu_custom_call.1} parent=0
    _
  %s6 = ssub.s32 1, %s4
  %s7 = scalar_select 0, %s6, %s4
  $region1: #{tpu_custom_call.1} parent=0
    #allocation2 [shape = 'u8[12288]{0}', space=vmem, size = 0x3000, scoped, tag = 'input window, operand 0, single buffered']
    #allocation3 [shape = 's32[1]{0}', space=sflag, size = 0x4, scoped, tag = 'scoped memory for tpu_custom_call.1']
    #allocation4 [shape = 's32[1]{0}', space=sflag, size = 0x4, scoped, tag = 'scoped memory for tpu_custom_call.1']
    #allocation5 [shape = 'u8[12288]{0}', space=vmem, size = 0x3000, scoped, tag = 'output window, operand 0, single buffered']
    %8 = vsyncpa [#allocation3], 0
    %9 = vsyncpa [#allocation4], 0
    // Predicated region
    $region2: #{tpu_custom_call.1} parent=1 // pred_check
      _
    $region3: #{tpu_custom_call.1} parent=1 // pred_check_branch
      %11 = sbr.rel (0) target = $region5
    $region4: #{tpu_custom_call.1} parent=1 // pred_region
      %s13 = ssub.s32 384, 384
      %14 = vsyncadd [#allocation3], %s13
      %s16 = sshll.u32 [#allocation2], 4
      %s17 = int_to_ptr.vmem [resolvable:$true] %s16
      %19 = dma.hbm_to_vmem [thread:$0]  %s0, 384, %s17, [#allocation3]
    $region5: #{tpu_custom_call.1} parent=1 // pred_fallthru
      _
    // Predicated region
    $region6: #{tpu_custom_call.1} parent=1 // pred_check
      _
    $region7: #{tpu_custom_call.1} parent=1 // pred_check_branch
      %21 = sbr.rel (0) target = $region9
    $region8: #{tpu_custom_call.1} parent=1 // pred_region
      _
    $region9: #{tpu_custom_call.1} parent=1 // pred_fallthru
      _
    // Predicated region
    $region10: #{tpu_custom_call.1} parent=1 // pred_check
      _
    $region11: #{tpu_custom_call.1} parent=1 // pred_check_branch
      %23 = sbr.rel (0) target = $region13
    $region12: #{tpu_custom_call.1} parent=1 // pred_region
      _
    $region13: #{tpu_custom_call.1} parent=1 // pred_fallthru
      _
    // Predicated region
    $region14: #{tpu_custom_call.1} parent=1 // pred_check
      _
    $region15: #{tpu_custom_call.1} parent=1 // pred_check_branch
      %25 = sbr.rel (0) target = $region17
    $region16: #{tpu_custom_call.1} parent=1 // pred_region
      %26 = dma.done [#allocation3], 384
    $region17: #{tpu_custom_call.1} parent=1 // pred_fallthru
      _
    %v27 = vld [vmem:[%s1] sm:$0xff]
    %v28 = vld [vmem:[%s2] sm:$0xff]
    %v29 = vld [vmem:[#allocation2] sm:$0xff]
    %v30 = vld [vmem:[#allocation2 + $0x8] sm:$0xff]
    %v31 = vld [vmem:[#allocation2 + $0x10] sm:$0xff]
    %33 = vset.pattern.permute.xlu0 0
    %34 = vperm.xlu0 %33, %v27
    %v35 = vpop.permute.xlu0 %34
    %v37 = vmul.f32 %v35, %v29
    %v38 = vmul.f32 %v35, %v30
    %v39 = vmul.f32 %v35, %v31
    %40 = vset.pattern.permute.xlu0 1
    %41 = vperm.xlu0 %40, %v27
    %v42 = vpop.permute.xlu0 %41
    %v44 = vmul.f32 %v42, %v29
    %v45 = vmul.f32 %v42, %v30
    %v46 = vmul.f32 %v42, %v31
    %50 = vrot.lane.b32.xlu0 %v44, 127
    %v51 = vpop.permute.xlu0 %50
    %52 = vrot.lane.b32.xlu0 %v45, 127
    %v53 = vpop.permute.xlu0 %52
    %54 = vrot.lane.b32.xlu0 %v46, 127
    %v55 = vpop.permute.xlu0 %54
    %vm56 = vcmask 1039360
    %v57 = vsel %vm56, %v51, %v53
    %v58 = vsel %vm56, %v53, %v55
    %v62 = vadd.f32 %v37, %v57
    %v63 = vadd.f32 %v38, %v58
    %v64 = vadd.f32 %v39, %v55
    %65 = vset.pattern.permute.xlu0 2
    %66 = vperm.xlu0 %65, %v27
    %v67 = vpop.permute.xlu0 %66
    %v69 = vmul.f32 %v67, %v29
    %v70 = vmul.f32 %v67, %v30
    %v71 = vmul.f32 %v67, %v31
    %75 = vrot.lane.b32.xlu0 %v69, 126
    %v76 = vpop.permute.xlu0 %75
    %77 = vrot.lane.b32.xlu0 %v70, 126
    %v78 = vpop.permute.xlu0 %77
    %79 = vrot.lane.b32.xlu0 %v71, 126
    %v80 = vpop.permute.xlu0 %79
    %vm81 = vcmask 1031168
    %v82 = vsel %vm81, %v76, %v78
    %v83 = vsel %vm81, %v78, %v80
    %v87 = vadd.f32 %v62, %v82
    %v88 = vadd.f32 %v63, %v83
    %v89 = vadd.f32 %v64, %v80
    %90 = vset.pattern.permute.xlu0 3
    %91 = vperm.xlu0 %90, %v27
    %v92 = vpop.permute.xlu0 %91
    %v94 = vmul.f32 %v92, %v29
    %v95 = vmul.f32 %v92, %v30
    %v96 = vmul.f32 %v92, %v31
    %100 = vrot.lane.b32.xlu0 %v94, 110
    %v101 = vpop.permute.xlu0 %100
    %102 = vrot.lane.b32.xlu0 %v95, 110
    %v103 = vpop.permute.xlu0 %102
    %104 = vrot.lane.b32.xlu0 %v96, 110
    %v105 = vpop.permute.xlu0 %104
    %vm106 = vcmask 900096
    %v107 = vsel %vm106, %v101, %v103
    %v108 = vsel %vm106, %v103, %v105
    %v112 = vadd.f32 %v87, %v107
    %v113 = vadd.f32 %v88, %v108
    %v114 = vadd.f32 %v89, %v105
    %115 = vset.pattern.permute.xlu0 4
    %116 = vperm.xlu0 %115, %v27
    %v117 = vpop.permute.xlu0 %116
    %v119 = vmul.f32 %v117, %v29
    %v120 = vmul.f32 %v117, %v30
    %v121 = vmul.f32 %v117, %v31
    %125 = vrot.lane.b32.xlu0 %v119, 109
    %v126 = vpop.permute.xlu0 %125
    %127 = vrot.lane.b32.xlu0 %v120, 109
    %v128 = vpop.permute.xlu0 %127
    %129 = vrot.lane.b32.xlu0 %v121, 109
    %v130 = vpop.permute.xlu0 %129
    %vm131 = vcmask 891904
    %v132 = vsel %vm131, %v126, %v128
    %v133 = vsel %vm131, %v128, %v130
    %v137 = vadd.f32 %v112, %v132
    %v138 = vadd.f32 %v113, %v133
    %v139 = vadd.f32 %v114, %v130
    %140 = vset.pattern.permute.xlu0 5
    %141 = vperm.xlu0 %140, %v27
    %v142 = vpop.permute.xlu0 %141
    %v144 = vmul.f32 %v142, %v29
    %v145 = vmul.f32 %v142, %v30
    %v146 = vmul.f32 %v142, %v31
    %150 = vrot.lane.b32.xlu0 %v144, 108
    %v151 = vpop.permute.xlu0 %150
    %152 = vrot.lane.b32.xlu0 %v145, 108
    %v153 = vpop.permute.xlu0 %152
    %154 = vrot.lane.b32.xlu0 %v146, 108
    %v155 = vpop.permute.xlu0 %154
    %vm156 = vcmask 883712
    %v157 = vsel %vm156, %v151, %v153
    %v158 = vsel %vm156, %v153, %v155
    %v162 = vadd.f32 %v137, %v157
    %v163 = vadd.f32 %v138, %v158
    %v164 = vadd.f32 %v139, %v155
    %165 = vset.pattern.permute.xlu0 6
    %166 = vperm.xlu0 %165, %v27
    %v167 = vpop.permute.xlu0 %166
    %v169 = vmul.f32 %v167, %v29
    %v170 = vmul.f32 %v167, %v30
    %v171 = vmul.f32 %v167, %v31
    %175 = vrot.lane.b32.xlu0 %v169, 92
    %v176 = vpop.permute.xlu0 %175
    %177 = vrot.lane.b32.xlu0 %v170, 92
    %v178 = vpop.permute.xlu0 %177
    %179 = vrot.lane.b32.xlu0 %v171, 92
    %v180 = vpop.permute.xlu0 %179
    %vm181 = vcmask 752640
    %v182 = vsel %vm181, %v176, %v178
    %v183 = vsel %vm181, %v178, %v180
    %v187 = vadd.f32 %v162, %v182
    %v188 = vadd.f32 %v163, %v183
    %v189 = vadd.f32 %v164, %v180
    %190 = vset.pattern.permute.xlu0 7
    %191 = vperm.xlu0 %190, %v27
    %v192 = vpop.permute.xlu0 %191
    %v194 = vmul.f32 %v192, %v29
    %v195 = vmul.f32 %v192, %v30
    %v196 = vmul.f32 %v192, %v31
    %200 = vrot.lane.b32.xlu0 %v194, 91
    %v201 = vpop.permute.xlu0 %200
    %202 = vrot.lane.b32.xlu0 %v195, 91
    %v203 = vpop.permute.xlu0 %202
    %204 = vrot.lane.b32.xlu0 %v196, 91
    %v205 = vpop.permute.xlu0 %204
    %vm206 = vcmask 744448
    %v207 = vsel %vm206, %v201, %v203
    %v208 = vsel %vm206, %v203, %v205
    %v212 = vadd.f32 %v187, %v207
    %v213 = vadd.f32 %v188, %v208
    %v214 = vadd.f32 %v189, %v205
    %215 = vset.pattern.permute.xlu0 8
    %216 = vperm.xlu0 %215, %v27
    %v217 = vpop.permute.xlu0 %216
    %v219 = vmul.f32 %v217, %v29
    %v220 = vmul.f32 %v217, %v30
    %v221 = vmul.f32 %v217, %v31
    %225 = vrot.lane.b32.xlu0 %v219, 90
    %v226 = vpop.permute.xlu0 %225
    %227 = vrot.lane.b32.xlu0 %v220, 90
    %v228 = vpop.permute.xlu0 %227
    %229 = vrot.lane.b32.xlu0 %v221, 90
    %v230 = vpop.permute.xlu0 %229
    %vm231 = vcmask 736256
    %v232 = vsel %vm231, %v226, %v228
    %v233 = vsel %vm231, %v228, %v230
    %v237 = vadd.f32 %v212, %v232
    %v238 = vadd.f32 %v213, %v233
    %v239 = vadd.f32 %v214, %v230
    %241 = vset.pattern.permute.xlu0 0
    %242 = vperm.xlu0 %241, %v28
    %v243 = vpop.permute.xlu0 %242
    %v245 = vadd.f32 %v237, %v243
    %v246 = vadd.f32 %v238, %v243
    %v247 = vadd.f32 %v239, %v243
    %248 = vst [vmem:[#allocation5] sm:$0xff] %v245
    %249 = vst [vmem:[#allocation5 + $0x8] sm:$0xff] %v246
    %vm250 = vcmask 261120
    %251 = vst.msk [vmem:[#allocation5 + $0x10] sm:$0xff] %vm250, %v247
    // Predicated region
    $region18: #{tpu_custom_call.1} parent=1 // pred_check
      _
    $region19: #{tpu_custom_call.1} parent=1 // pred_check_branch
      %253 = sbr.rel (0) target = $region21
    $region20: #{tpu_custom_call.1} parent=1 // pred_region
      %s255 = ssub.s32 384, 384
      %256 = vsyncadd [#allocation4], %s255
      %s258 = sshll.u32 [#allocation5], 4
      %s259 = int_to_ptr.vmem [resolvable:$true] %s258
      %261 = dma.vmem_to_hbm [thread:$0]  %s259, 384, %s3, [#allocation4]
    $region21: #{tpu_custom_call.1} parent=1 // pred_fallthru
      _
    // Predicated region
    $region22: #{tpu_custom_call.1} parent=1 // pred_check
      _
    $region23: #{tpu_custom_call.1} parent=1 // pred_check_branch
      %263 = sbr.rel (0) target = $region25
    $region24: #{tpu_custom_call.1} parent=1 // pred_region
      %264 = dma.done [#allocation4], 384
    $region25: #{tpu_custom_call.1} parent=1 // pred_fallthru
      _
    %265 = vsyncpa [#allocation3], 1
    %266 = vsyncpa [#allocation4], 1

</llo_original>
